<compile_context>
chip_gen: v5e
topology: v5e:2x2
jax: 0.10.0
libtpu: 0.0.40
codegen_flags: <defaults>
</compile_context>

<pallas_src>
import jax
import jax.numpy as jnp
from jax.experimental import pallas as pl
from jax.experimental.pallas import tpu as pltpu

_LANE = 128


def _mish_kernel(x_ref, o_ref):
    # Upcast to f32 for transcendental accuracy (no-op for f32 inputs).
    x = x_ref[...].astype(jnp.float32)
    # mish(x) = x * tanh(softplus(x)).  With u = 1 + exp(x):
    #     tanh(log u) = (u^2 - 1) / (u^2 + 1)
    # -> only 1 exp + 1 reciprocal on the EUP (vs exp + log1p + tanh).
    # Clamp the exp argument so u^2 never overflows; for x > 20 the true
    # result equals x to f32 precision and is selected by the where below.
    xs = jnp.minimum(x, 20.0)
    u = 1.0 + jnp.exp(xs)
    u2 = u * u
    t = (u2 - 1.0) * pl.reciprocal(u2 + 1.0)  # exact recip (approx=True if tol allows)
    y = jnp.where(x > 20.0, x, x * t)
    o_ref[...] = y.astype(o_ref.dtype)


def _pick_cols(padded_total: int) -> int:
    for c in (8192, 4096, 2048, 1024, 512, 256, 128):
        if padded_total % c == 0:
            return c
    return _LANE  # unreachable: padded_total is a multiple of 128


def _layout(total: int):
    """Flat element count -> (padded_total, rows, cols) with cols % 128 == 0."""
    if total % _LANE == 0:
        padded = total                      # no pad copy needed
    else:
        chunk = 8 * 1024                    # pad so cols >= 1024, rows % 8 == 0
        padded = ((total + chunk - 1) // chunk) * chunk
    cols = _pick_cols(padded)
    rows = padded // cols
    return padded, rows, cols


def _pick_block_rows(rows: int, cols: int, itemsize: int, block_bytes: int) -> int:
    # sublane multiple per packed dtype: 8 (f32), 16 (bf16), 32 (int8/fp8)
    sub = 8 * max(1, 4 // max(1, itemsize))
    if rows <= sub:
        return rows                         # block == full rows dim -> always legal
    tr = max(block_bytes // (cols * itemsize), sub)
    tr = max((tr // sub) * sub, sub)
    return min(tr, rows)


def mish(x: jax.Array, *, block_bytes: int = 4 << 20) -> jax.Array:
    """Elementwise Mish over any-shape tensor via a Pallas TPU kernel."""
    orig_shape = x.shape
    total = x.size
    if total == 0:
        return x

    flat = x.reshape(-1)
    padded, rows, cols = _layout(total)
    if padded != total:
        flat = jnp.pad(flat, (0, padded - total))
    x2 = flat.reshape(rows, cols)

    itemsize = jnp.dtype(x.dtype).itemsize
    tr = _pick_block_rows(rows, cols, itemsize, block_bytes)
    grid = (pl.cdiv(rows, tr),)

    out = pl.pallas_call(
        _mish_kernel,
        out_shape=jax.ShapeDtypeStruct((rows, cols), x.dtype),
        grid_spec=pltpu.PrefetchScalarGridSpec(
            num_scalar_prefetch=0,
            grid=grid,
            in_specs=[pl.BlockSpec((tr, cols), lambda i: (i, 0))],
            out_specs=pl.BlockSpec((tr, cols), lambda i: (i, 0)),
        ),
        compiler_params=pltpu.CompilerParams(
            dimension_semantics=("parallel",),
        ),
    )(x2)

    out_flat = out.reshape(-1)
    if padded != total:
        out_flat = out_flat[:total]
    return out_flat.reshape(orig_shape)


# TODO(synk): only the forward pass of Mish_func is implemented; the custom
# autograd backward is not needed for the module's forward semantics.


def _ref_mish(x):
    return x * jnp.tanh(jnp.logaddexp(0.0, x))


if __name__ == "__main__":
    key = jax.random.PRNGKey(0)

    # Main check: small NCHW f32 tensor (matches the PyTorch module usage).
    x = jax.random.normal(key, (2, 4, 16, 16), dtype=jnp.float32)
    y = jax.block_until_ready(mish(x))
    ref = _ref_mish(x)
    assert y.shape == x.shape and y.dtype == x.dtype
    assert jnp.allclose(y, ref, atol=1e-5), "f32 mismatch vs reference"

    # Odd-shape check: exercises the pad-to-lane-dense fallback (no masked stores).
    x_odd = jax.random.normal(jax.random.PRNGKey(1), (2, 3, 7, 7), dtype=jnp.float32)
    y_odd = jax.block_until_ready(mish(x_odd))
    assert jnp.allclose(y_odd, _ref_mish(x_odd), atol=1e-5), "odd-shape mismatch"

    # bf16 check: compute happens in f32 inside the kernel, cast back on store.
    x_bf = x.astype(jnp.bfloat16)
    y_bf = jax.block_until_ready(mish(x_bf))
    assert y_bf.dtype == jnp.bfloat16
    assert jnp.allclose(y_bf.astype(jnp.float32), _ref_mish(x), atol=2e-2), "bf16 mismatch"

    print("KERNEL_OK")
</pallas_src>

<mosaic_0001>
module attributes {stable_mosaic.version = 11 : i64} {
  func.func @_mish_kernel(%arg0: i32, %arg1: memref<1x2048xf32, #tpu.memory_space<vmem>>, %arg2: memref<1x2048xf32, #tpu.memory_space<vmem>>) attributes {dimension_semantics = [#tpu.dimension_semantics<parallel>], iteration_bounds = array<i64: 1>, scalar_prefetch = 0 : i64, scratch_operands = 0 : i64, tpu.core_type = #tpu.core_type<tc>, window_params = [{transform_indices = @transform_0, window_bounds = array<i64: 1, 2048>}, {transform_indices = @transform_1, window_bounds = array<i64: 1, 2048>}]} {
    %c0 = arith.constant 0 : index
    %c0_0 = arith.constant 0 : index
    %0 = vector.load %arg1[%c0, %c0_0] : memref<1x2048xf32, #tpu.memory_space<vmem>>, vector<1x2048xf32>
    %cst = arith.constant 2.000000e+01 : f32
    %1 = vector.broadcast %cst : f32 to vector<1x2048xf32>
    %2 = arith.minimumf %0, %1 : vector<1x2048xf32>
    %3 = math.exp %2 : vector<1x2048xf32>
    %cst_1 = arith.constant 1.000000e+00 : f32
    %4 = vector.broadcast %cst_1 : f32 to vector<1x2048xf32>
    %5 = arith.addf %4, %3 : vector<1x2048xf32>
    %6 = arith.mulf %5, %5 : vector<1x2048xf32>
    %cst_2 = arith.constant 1.000000e+00 : f32
    %7 = vector.broadcast %cst_2 : f32 to vector<1x2048xf32>
    %8 = arith.subf %6, %7 : vector<1x2048xf32>
    %cst_3 = arith.constant 1.000000e+00 : f32
    %9 = vector.broadcast %cst_3 : f32 to vector<1x2048xf32>
    %10 = arith.addf %6, %9 : vector<1x2048xf32>
    %11 = tpu.reciprocal %10 : vector<1x2048xf32> -> vector<1x2048xf32>
    %12 = arith.mulf %8, %11 : vector<1x2048xf32>
    %cst_4 = arith.constant 2.000000e+01 : f32
    %13 = vector.broadcast %cst_4 : f32 to vector<1x2048xf32>
    %14 = arith.cmpf ogt, %0, %13 : vector<1x2048xf32>
    %15 = arith.mulf %0, %12 : vector<1x2048xf32>
    %16 = arith.select %14, %0, %15 : vector<1x2048xi1>, vector<1x2048xf32>
    %c0_5 = arith.constant 0 : index
    %c0_6 = arith.constant 0 : index
    %17 = vector.load %arg2[%c0_5, %c0_6] : memref<1x2048xf32, #tpu.memory_space<vmem>>, vector<1x2048xf32>
    tpu.vector_store %arg2[%c0_5, %c0_6], %16 {strides = array<i32>} : memref<1x2048xf32, #tpu.memory_space<vmem>>, vector<1x2048xf32>,
    return
  }
  func.func @transform_0(%arg0: i32) -> (i32, i32) {
    %c0_i32 = arith.constant 0 : i32
    %c0_i32_0 = arith.constant 0 : i32
    return %arg0, %c0_i32 : i32, i32
  }
  func.func @transform_1(%arg0: i32) -> (i32, i32) {
    %c0_i32 = arith.constant 0 : i32
    %c0_i32_0 = arith.constant 0 : i32
    return %arg0, %c0_i32 : i32, i32
  }
}

</mosaic_0001>

<llo_original>
// kernel: tpu_custom_call.1
$region0: #{tpu_custom_call.1}
  #allocation0 [shape = 'u32[]', space=smem, size = 0x4, offset = 0x4, fixed_abs, tag = 'smem constant byte address 0x4 - core index']
  #allocation1 [shape = 'u32[72,128]{1,0:T(1,128)}', space=vmem, size = 0x9000, scoped, tag = 'internal scratch']
  %s0 = inlined_call_operand.hbm [shape: f32[1,2048], index: 0, kind: input, shape index: {}]
  %s1 = inlined_call_operand.hbm [shape: f32[1,2048], index: 1, kind: output, shape index: {}]
  %s2 = sld [smem:[#allocation0]]
  $region18: #{tpu_custom_call.1} parent=0
    _
  %s4 = ssub.s32 1, %s2
  %s5 = scalar_select 0, %s4, %s2
  $region1: #{tpu_custom_call.1} parent=0
    #allocation2 [shape = 'u8[8192]{0}', space=vmem, size = 0x2000, scoped, tag = 'input window, operand 0, single buffered']
    #allocation3 [shape = 's32[1]{0}', space=sflag, size = 0x4, scoped, tag = 'scoped memory for tpu_custom_call.1']
    #allocation4 [shape = 's32[1]{0}', space=sflag, size = 0x4, scoped, tag = 'scoped memory for tpu_custom_call.1']
    #allocation5 [shape = 'u8[8192]{0}', space=vmem, size = 0x2000, scoped, tag = 'output window, operand 0, single buffered']
    %6 = vsyncpa [#allocation3], 0
    %7 = vsyncpa [#allocation4], 0
    // Predicated region
    $region2: #{tpu_custom_call.1} parent=1 // pred_check
      _
    $region3: #{tpu_custom_call.1} parent=1 // pred_check_branch
      %9 = sbr.rel (0) target = $region5
    $region4: #{tpu_custom_call.1} parent=1 // pred_region
      %11 = vsyncadd [#allocation3], 0
      %s13 = sshll.u32 %s0, 4
      %s14 = int_to_ptr.hbm [resolvable:$true] %s13
      %s15 = sshll.u32 [#allocation2], 4
      %s16 = int_to_ptr.vmem [resolvable:$true] %s15
      %18 = dma.hbm_to_vmem [thread:$0]  %s14, 256, %s16, [#allocation3]
    $region5: #{tpu_custom_call.1} parent=1 // pred_fallthru
      _
    // Predicated region
    $region6: #{tpu_custom_call.1} parent=1 // pred_check
      _
    $region7: #{tpu_custom_call.1} parent=1 // pred_check_branch
      %20 = sbr.rel (0) target = $region9
    $region8: #{tpu_custom_call.1} parent=1 // pred_region
      %22 = dma.done [#allocation3], 256
    $region9: #{tpu_custom_call.1} parent=1 // pred_fallthru
      _
    %v23 = vld [vmem:[#allocation2] sm:$0xff]
    %v24 = vld [vmem:[#allocation2 + $0x8] sm:$0xff]
    %v25 = vmin.f32 %v23, 20.0
    %v26 = vmin.f32 %v24, 20.0
    %v27 = vmul.f32 %v25, 1.442695
    %v28 = vpow.pop %v27
    %v29 = vmul.f32 %v26, 1.442695
    %v30 = vpow.pop %v29
    %v31 = vadd.f32 %v28, 1.0
    %v32 = vadd.f32 %v30, 1.0
    %v33 = vmul.f32 %v31, %v31
    %v34 = vmul.f32 %v32, %v32
    %v35 = vsub.f32 %v33, 1.0
    %v36 = vsub.f32 %v34, 1.0
    %v37 = vadd.f32 %v33, 1.0
    %v38 = vadd.f32 %v34, 1.0
    %v39 = vrcp.pop %v37
    %v40 = vmul.f32 %v37, %v39
    %v41 = vsub.f32 1.0, %v40
    %v42 = vmul.f32 %v39, %v41
    %v43 = vadd.f32 %v39, %v42
    %vm44 = vweird.f32 %v37
    %vm45 = vweird.f32 %v39
    %vm46 = vmor %vm44, %vm45
    %v47 = vsel %vm46, %v39, %v43
    %v48 = vand.u32 2147483647, %v37
    %vm49 = vcmp.eq.f32.partialorder %v48, 8.507059e+37
    %v50 = vand.u32 %v37, 2147483648
    %v51 = vor.u32 1.1754944e-38, %v50
    %v52 = vsel %vm49, %v51, %v47
    %v53 = vrcp.pop %v38
    %v54 = vmul.f32 %v38, %v53
    %v55 = vsub.f32 1.0, %v54
    %v56 = vmul.f32 %v53, %v55
    %v57 = vadd.f32 %v53, %v56
    %vm58 = vweird.f32 %v38
    %vm59 = vweird.f32 %v53
    %vm60 = vmor %vm58, %vm59
    %v61 = vsel %vm60, %v53, %v57
    %v62 = vand.u32 2147483647, %v38
    %vm63 = vcmp.eq.f32.partialorder %v62, 8.507059e+37
    %v64 = vand.u32 %v38, 2147483648
    %v65 = vor.u32 1.1754944e-38, %v64
    %v66 = vsel %vm63, %v65, %v61
    %v67 = vmul.f32 %v35, %v52
    %v68 = vmul.f32 %v36, %v66
    %vm69 = vcmp.gt.f32.partialorder %v23, 20.0
    %vm70 = vcmp.gt.f32.partialorder %v24, 20.0
    %v71 = vmul.f32 %v23, %v67
    %v72 = vmul.f32 %v24, %v68
    %v73 = vsel %vm69, %v23, %v71
    %v74 = vsel %vm70, %v24, %v72
    %75 = vst [vmem:[#allocation5] sm:$0xff] %v73
    %76 = vst [vmem:[#allocation5 + $0x8] sm:$0xff] %v74
    // Predicated region
    $region10: #{tpu_custom_call.1} parent=1 // pred_check
      _
    $region11: #{tpu_custom_call.1} parent=1 // pred_check_branch
      %78 = sbr.rel (0) target = $region13
    $region12: #{tpu_custom_call.1} parent=1 // pred_region
      %80 = vsyncadd [#allocation4], 0
      %s82 = sshll.u32 [#allocation5], 4
      %s83 = int_to_ptr.vmem [resolvable:$true] %s82
      %s84 = sshll.u32 %s1, 4
      %s85 = int_to_ptr.hbm [resolvable:$true] %s84
      %87 = dma.vmem_to_hbm [thread:$0]  %s83, 256, %s85, [#allocation4]
    $region13: #{tpu_custom_call.1} parent=1 // pred_fallthru
      _
    // Predicated region
    $region14: #{tpu_custom_call.1} parent=1 // pred_check
      _
    $region15: #{tpu_custom_call.1} parent=1 // pred_check_branch
      %89 = sbr.rel (0) target = $region17
    $region16: #{tpu_custom_call.1} parent=1 // pred_region
      %91 = dma.done [#allocation4], 256
    $region17: #{tpu_custom_call.1} parent=1 // pred_fallthru
      _
    %92 = vsyncpa [#allocation3], 1
    %93 = vsyncpa [#allocation4], 1

</llo_original>
